<compile_context>
chip_gen: v7x
topology: tpu7x:2x2x1
jax: 0.10.0
libtpu: 0.0.40
codegen_flags: <defaults>
</compile_context>

<pallas_src>
import jax
import jax.numpy as jnp
from jax.experimental import pallas as pl
from jax.experimental.pallas import tpu as pltpu

INPUT_SIZE = 2
HIDDEN = 256
OUTPUT_SIZE = 2
K_PAD = 8      # layer-1 contraction padded to 8 (coords + bias-ones + zeros)
OUT_PAD = 8    # output rows padded to 8 sublanes


def _round_up(n, m):
    return ((n + m - 1) // m) * m


def _cdiv(a, b):
    return -(-a // b)


def mlp_kernel(x_ref, w1_ref, w2_ref, b2_ref, w3_ref, b3_ref, y_ref):
    """One batch tile of the MLP in features-major layout.

    x_ref : (8, TB)    f32   rows = [px, py, 1, 0, 0, 0, 0, 0]
    w1_ref: (256, 8)   f32   cols = [W1[:,0], W1[:,1], b1, 0, 0, 0, 0, 0]
    w2_ref: (256, 256) f32 | bf16
    b2_ref: (256, 1)   f32
    w3_ref: (8, 256)   f32 | bf16   (rows 2..7 are zero)
    b3_ref: (8, 1)     f32          (rows 2..7 are zero)
    y_ref : (8, TB)    f32          (rows 2..7 come out zero)
    """
    x = x_ref[...]

    # ---- Layer 1 (+bias folded into the "ones" feature): MXU, f32, K=8. ----
    h1 = jnp.dot(w1_ref[...], x, preferred_element_type=jnp.float32)
    h1 = jnp.maximum(h1, 0.0)

    # ---- Layer 2 (256x256): MXU, f32 accumulation; bias is a column add. ----
    h2 = jnp.dot(w2_ref[...], h1.astype(w2_ref.dtype),
                 preferred_element_type=jnp.float32) + b2_ref[...]
    h2 = jnp.maximum(h2, 0.0)

    # ---- Layer 3 (256 -> 2, padded to 8 output rows). ----
    y = jnp.dot(w3_ref[...], h2.astype(w3_ref.dtype),
                preferred_element_type=jnp.float32) + b3_ref[...]
    y_ref[...] = y.astype(y_ref.dtype)


def image_to_real_world_mlp(x, params, *, tb=2048, mxu_bf16=False):
    """x: (B, 2) pixel coordinates. Returns (B, 2) real-world coordinates (f32)."""
    B = x.shape[0]
    assert x.shape[1] == INPUT_SIZE
    f32 = jnp.float32
    mxu_dt = jnp.bfloat16 if mxu_bf16 else f32

    # --- Tile / grid selection ------------------------------------------------
    LANE_TILE = 256       # batch tile granularity (keeps stores lane-dense)
    MAX_TILE = 4096       # VMEM cap: ~14 MiB/step of intermediates at 4096
    tb = int(min(max(_round_up(tb, LANE_TILE), LANE_TILE), MAX_TILE))
    steps = _cdiv(B, tb)
    if steps == 1 and B > LANE_TILE:
        steps = 2         # guarantee >= 2 grid steps so v7x's 2nd TC gets work
    tile = min(_round_up(_cdiv(B, steps), LANE_TILE), tb)
    Bp = steps * tile     # padding bounded per step (not a whole tb)

    # --- Features-major input with the bias feature (row 2 == 1) --------------
    xf = x.astype(f32)
    x_aug = jnp.concatenate(
        [xf,
         jnp.ones((B, 1), f32),
         jnp.zeros((B, K_PAD - INPUT_SIZE - 1), f32)], axis=1)        # (B, 8)
    x_aug = jnp.pad(x_aug, ((0, Bp - B), (0, 0)))                      # (Bp, 8)
    xT = x_aug.T                                                       # (8, Bp)

    # --- Weights in features-major orientation --------------------------------
    w1a = jnp.concatenate(
        [params["w1"].T.astype(f32),                                   # (256, 2)
         params["b1"].reshape(HIDDEN, 1).astype(f32),                  # bias col
         jnp.zeros((HIDDEN, K_PAD - INPUT_SIZE - 1), f32)], axis=1)    # (256, 8)
    w2T = params["w2"].T.astype(mxu_dt)                                # (256, 256)
    b2c = params["b2"].reshape(HIDDEN, 1).astype(f32)                  # (256, 1)
    w3a = jnp.pad(params["w3"].T,
                  ((0, OUT_PAD - OUTPUT_SIZE), (0, 0))).astype(mxu_dt) # (8, 256)
    b3c = jnp.pad(params["b3"].reshape(OUTPUT_SIZE, 1),
                  ((0, OUT_PAD - OUTPUT_SIZE), (0, 0))).astype(f32)    # (8, 1)

    w_bytes = 2 if mxu_bf16 else 4
    cost = pl.CostEstimate(
        flops=2 * Bp * (K_PAD * HIDDEN + HIDDEN * HIDDEN + HIDDEN * OUT_PAD),
        transcendentals=0,
        bytes_accessed=(Bp * K_PAD * 4 + Bp * OUT_PAD * 4
                        + w1a.size * 4 + w2T.size * w_bytes + b2c.size * 4
                        + w3a.size * w_bytes + b3c.size * 4),
    )

    yT = pl.pallas_call(
        mlp_kernel,
        out_shape=jax.ShapeDtypeStruct((OUT_PAD, Bp), f32),
        grid_spec=pltpu.PrefetchScalarGridSpec(
            num_scalar_prefetch=0,
            grid=(steps,),
            in_specs=[
                pl.BlockSpec((K_PAD, tile), lambda i: (0, i)),        # xT tile
                # Grid-invariant weights/biases: constant index_maps, so the
                # pipeliner does not re-issue their DMAs after step 0.
                pl.BlockSpec((HIDDEN, K_PAD), lambda i: (0, 0)),      # w1 (+b1)
                pl.BlockSpec((HIDDEN, HIDDEN), lambda i: (0, 0)),     # w2
                pl.BlockSpec((HIDDEN, 1), lambda i: (0, 0)),          # b2
                pl.BlockSpec((OUT_PAD, HIDDEN), lambda i: (0, 0)),    # w3
                pl.BlockSpec((OUT_PAD, 1), lambda i: (0, 0)),         # b3
            ],
            out_specs=pl.BlockSpec((OUT_PAD, tile), lambda i: (0, i)),
        ),
        compiler_params=pltpu.CompilerParams(
            dimension_semantics=("parallel",),       # batch grid: megacore-shardable
            vmem_limit_bytes=32 * 1024 * 1024,       # lift v5e's 16 MiB default
        ),
        cost_estimate=cost,
    )(xT, w1a, w2T, b2c, w3a, b3c)

    return yT[:OUTPUT_SIZE, :B].T


def init_params(key):
    """PyTorch nn.Linear-style init: U(-1/sqrt(fan_in), +1/sqrt(fan_in)).
    Weights stored pre-transposed as (in_features, out_features)."""
    k = jax.random.split(key, 6)

    def lin(kw, kb, fan_in, fan_out):
        bound = 1.0 / jnp.sqrt(fan_in)
        w = jax.random.uniform(kw, (fan_in, fan_out), jnp.float32, -bound, bound)
        b = jax.random.uniform(kb, (1, fan_out), jnp.float32, -bound, bound)
        return w, b

    w1, b1 = lin(k[0], k[1], INPUT_SIZE, HIDDEN)
    w2, b2 = lin(k[2], k[3], HIDDEN, HIDDEN)
    w3, b3 = lin(k[4], k[5], HIDDEN, OUTPUT_SIZE)
    return {"w1": w1, "b1": b1, "w2": w2, "b2": b2, "w3": w3, "b3": b3}


def reference_f32(x, p):
    """Full-precision f32 reference matching the PyTorch module."""
    hp = jax.lax.Precision.HIGHEST
    h1 = jnp.maximum(jnp.dot(x, p["w1"], precision=hp) + p["b1"], 0.0)
    h2 = jnp.maximum(jnp.dot(h1, p["w2"], precision=hp) + p["b2"], 0.0)
    return jnp.dot(h2, p["w3"], precision=hp) + p["b3"]


if __name__ == "__main__":
    key = jax.random.PRNGKey(0)
    kx, kp = jax.random.split(key)
    params = init_params(kp)

    # Small smoke test (pads to a single 256-row tile).
    B = 8
    x = jax.random.uniform(kx, (B, INPUT_SIZE), jnp.float32, 0.0, 640.0)
    y = jax.block_until_ready(image_to_real_world_mlp(x, params))
    assert y.shape == (B, OUTPUT_SIZE)
    y_ref = reference_f32(x, params)
    tol = 2e-2 * float(jnp.max(jnp.abs(y_ref))) + 1e-2
    assert float(jnp.max(jnp.abs(y - y_ref))) <= tol, "f32 kernel mismatch vs reference"

    # Non-multiple-of-tile batch (exercises the padding path).
    B2 = 13
    x2 = jax.random.uniform(jax.random.PRNGKey(1), (B2, INPUT_SIZE),
                            jnp.float32, 0.0, 640.0)
    y2 = jax.block_until_ready(image_to_real_world_mlp(x2, params))
    y2_ref = reference_f32(x2, params)
    assert y2.shape == (B2, OUTPUT_SIZE)
    tol2 = 2e-2 * float(jnp.max(jnp.abs(y2_ref))) + 1e-2
    assert float(jnp.max(jnp.abs(y2 - y2_ref))) <= tol2, "padding-path mismatch"

    # Multi-step grid (>= 2 "parallel" steps) + optional bf16 MXU operand path.
    B3 = 300
    x3 = jax.random.uniform(jax.random.PRNGKey(2), (B3, INPUT_SIZE),
                            jnp.float32, 0.0, 640.0)
    y3 = jax.block_until_ready(image_to_real_world_mlp(x3, params, mxu_bf16=True))
    y3_ref = reference_f32(x3, params)
    assert y3.shape == (B3, OUTPUT_SIZE)
    tol3 = 2e-2 * float(jnp.max(jnp.abs(y3_ref))) + 1e-2
    assert float(jnp.max(jnp.abs(y3 - y3_ref))) <= tol3, "bf16 kernel mismatch vs reference"

    print("KERNEL_OK")
</pallas_src>

<mosaic_0001>
module attributes {stable_mosaic.version = 11 : i64} {
  func.func @mlp_kernel(%arg0: i32, %arg1: memref<8x256xf32, #tpu.memory_space<vmem>>, %arg2: memref<256x8xf32, #tpu.memory_space<vmem>>, %arg3: memref<256x256xf32, #tpu.memory_space<vmem>>, %arg4: memref<256x1xf32, #tpu.memory_space<vmem>>, %arg5: memref<8x256xf32, #tpu.memory_space<vmem>>, %arg6: memref<8x1xf32, #tpu.memory_space<vmem>>, %arg7: memref<8x256xf32, #tpu.memory_space<vmem>>) attributes {dimension_semantics = [#tpu.dimension_semantics<parallel>], iteration_bounds = array<i64: 1>, scalar_prefetch = 0 : i64, scratch_operands = 0 : i64, tpu.core_type = #tpu.core_type<tc>, window_params = [{transform_indices = @transform_0, window_bounds = array<i64: 8, 256>}, {pipeline_mode = #tpu.pipeline_mode<synchronous>, transform_indices = @transform_1, window_bounds = array<i64: 256, 8>}, {pipeline_mode = #tpu.pipeline_mode<synchronous>, transform_indices = @transform_2, window_bounds = array<i64: 256, 256>}, {pipeline_mode = #tpu.pipeline_mode<synchronous>, transform_indices = @transform_3, window_bounds = array<i64: 256, 1>}, {pipeline_mode = #tpu.pipeline_mode<synchronous>, transform_indices = @transform_4, window_bounds = array<i64: 8, 256>}, {pipeline_mode = #tpu.pipeline_mode<synchronous>, transform_indices = @transform_5, window_bounds = array<i64: 8, 1>}, {transform_indices = @transform_6, window_bounds = array<i64: 8, 256>}]} {
    %c0 = arith.constant 0 : index
    %c0_0 = arith.constant 0 : index
    %0 = vector.load %arg1[%c0, %c0_0] : memref<8x256xf32, #tpu.memory_space<vmem>>, vector<8x256xf32>
    %c0_1 = arith.constant 0 : index
    %c0_2 = arith.constant 0 : index
    %1 = vector.load %arg2[%c0_1, %c0_2] : memref<256x8xf32, #tpu.memory_space<vmem>>, vector<256x8xf32>
    %cst = arith.constant dense<0.000000e+00> : vector<256x256xf32>
    %2 = tpu.matmul %1, %0, %cst {dimension_numbers = #tpu.dot_dimension_numbers<[1], [0], [0], [1], [0, 0, 1, 1], [], []>} : vector<256x8xf32>, vector<8x256xf32>, vector<256x256xf32> -> vector<256x256xf32>
    %cst_3 = arith.constant 0.000000e+00 : f32
    %3 = vector.broadcast %cst_3 : f32 to vector<256x256xf32>
    %4 = arith.maximumf %2, %3 : vector<256x256xf32>
    %c0_4 = arith.constant 0 : index
    %c0_5 = arith.constant 0 : index
    %5 = vector.load %arg3[%c0_4, %c0_5] : memref<256x256xf32, #tpu.memory_space<vmem>>, vector<256x256xf32>
    %cst_6 = arith.constant dense<0.000000e+00> : vector<256x256xf32>
    %6 = tpu.matmul %5, %4, %cst_6 {dimension_numbers = #tpu.dot_dimension_numbers<[1], [0], [0], [1], [0, 0, 1, 1], [], []>} : vector<256x256xf32>, vector<256x256xf32>, vector<256x256xf32> -> vector<256x256xf32>
    %c0_7 = arith.constant 0 : index
    %c0_8 = arith.constant 0 : index
    %7 = vector.load %arg4[%c0_7, %c0_8] : memref<256x1xf32, #tpu.memory_space<vmem>>, vector<256x1xf32>
    %8 = vector.broadcast %7 : vector<256x1xf32> to vector<256x256xf32>
    %9 = arith.addf %6, %8 : vector<256x256xf32>
    %cst_9 = arith.constant 0.000000e+00 : f32
    %10 = vector.broadcast %cst_9 : f32 to vector<256x256xf32>
    %11 = arith.maximumf %9, %10 : vector<256x256xf32>
    %c0_10 = arith.constant 0 : index
    %c0_11 = arith.constant 0 : index
    %12 = vector.load %arg5[%c0_10, %c0_11] : memref<8x256xf32, #tpu.memory_space<vmem>>, vector<8x256xf32>
    %cst_12 = arith.constant dense<0.000000e+00> : vector<8x256xf32>
    %13 = tpu.matmul %12, %11, %cst_12 {dimension_numbers = #tpu.dot_dimension_numbers<[1], [0], [0], [1], [0, 0, 1, 1], [], []>} : vector<8x256xf32>, vector<256x256xf32>, vector<8x256xf32> -> vector<8x256xf32>
    %c0_13 = arith.constant 0 : index
    %c0_14 = arith.constant 0 : index
    %14 = vector.load %arg6[%c0_13, %c0_14] : memref<8x1xf32, #tpu.memory_space<vmem>>, vector<8x1xf32>
    %15 = vector.broadcast %14 : vector<8x1xf32> to vector<8x256xf32>
    %16 = arith.addf %13, %15 : vector<8x256xf32>
    %c0_15 = arith.constant 0 : index
    %c0_16 = arith.constant 0 : index
    %17 = vector.load %arg7[%c0_15, %c0_16] : memref<8x256xf32, #tpu.memory_space<vmem>>, vector<8x256xf32>
    tpu.vector_store %arg7[%c0_15, %c0_16], %16 {strides = array<i32>} : memref<8x256xf32, #tpu.memory_space<vmem>>, vector<8x256xf32>,
    return
  }
  func.func @transform_0(%arg0: i32) -> (i32, i32) {
    %c0_i32 = arith.constant 0 : i32
    %c0_i32_0 = arith.constant 0 : i32
    return %c0_i32, %arg0 : i32, i32
  }
  func.func @transform_1(%arg0: i32) -> (i32, i32) {
    %c0_i32 = arith.constant 0 : i32
    %c0_i32_0 = arith.constant 0 : i32
    %c0_i32_1 = arith.constant 0 : i32
    return %c0_i32, %c0_i32_0 : i32, i32
  }
  func.func @transform_2(%arg0: i32) -> (i32, i32) {
    %c0_i32 = arith.constant 0 : i32
    %c0_i32_0 = arith.constant 0 : i32
    %c0_i32_1 = arith.constant 0 : i32
    return %c0_i32, %c0_i32_0 : i32, i32
  }
  func.func @transform_3(%arg0: i32) -> (i32, i32) {
    %c0_i32 = arith.constant 0 : i32
    %c0_i32_0 = arith.constant 0 : i32
    %c0_i32_1 = arith.constant 0 : i32
    return %c0_i32, %c0_i32_0 : i32, i32
  }
  func.func @transform_4(%arg0: i32) -> (i32, i32) {
    %c0_i32 = arith.constant 0 : i32
    %c0_i32_0 = arith.constant 0 : i32
    %c0_i32_1 = arith.constant 0 : i32
    return %c0_i32, %c0_i32_0 : i32, i32
  }
  func.func @transform_5(%arg0: i32) -> (i32, i32) {
    %c0_i32 = arith.constant 0 : i32
    %c0_i32_0 = arith.constant 0 : i32
    %c0_i32_1 = arith.constant 0 : i32
    return %c0_i32, %c0_i32_0 : i32, i32
  }
  func.func @transform_6(%arg0: i32) -> (i32, i32) {
    %c0_i32 = arith.constant 0 : i32
    %c0_i32_0 = arith.constant 0 : i32
    return %c0_i32, %arg0 : i32, i32
  }
}

</mosaic_0001>

<llo_original>
// kernel: tpu_custom_call.1
$region0: #{tpu_custom_call.1}
  #allocation0 [shape = 'u32[]', space=smem, size = 0x4, offset = 0x4, fixed_abs, tag = 'smem constant byte address 0x4 - core index']
  #allocation1 [shape = 'u32[144,128]{1,0:T(1,128)}', space=vmem, size = 0x12000, scoped, tag = 'internal scratch']
  %s0 = inlined_call_operand.vmem [shape: f32[8,256], index: 0, kind: input, shape index: {}]
  %s1 = inlined_call_operand.vmem [shape: f32[256,8], index: 1, kind: input, shape index: {}]
  %s2 = inlined_call_operand.vmem [shape: f32[256,256], index: 2, kind: input, shape index: {}]
  %s3 = inlined_call_operand.vmem [shape: f32[256,1], index: 3, kind: input, shape index: {}]
  %s4 = inlined_call_operand.vmem [shape: f32[8,256], index: 4, kind: input, shape index: {}]
  %s5 = inlined_call_operand.vmem [shape: f32[8,1], index: 5, kind: input, shape index: {}]
  %s6 = inlined_call_operand.hbm [shape: f32[8,256], index: 6, kind: output, shape index: {}]
  %s7 = sld [smem:[#allocation0]]
  $region34: #{tpu_custom_call.1} parent=0
    _
  %s9 = ssub.s32 1, %s7
  %s10 = scalar_select 0, %s9, %s7
  $region1: #{tpu_custom_call.1} parent=0
    #allocation2 [shape = 'u8[8192]{0}', space=vmem, size = 0x2000, scoped, tag = 'output window, operand 0, single buffered']
    #allocation3 [shape = 's32[1]{0}', space=sflag, size = 0x4, scoped, tag = 'scoped memory for tpu_custom_call.1']
    %11 = vsyncpa [#allocation3], 0
    // Predicated region
    $region2: #{tpu_custom_call.1} parent=1 // pred_check
      _
    $region3: #{tpu_custom_call.1} parent=1 // pred_check_branch
      %13 = sbr.rel (0) target = $region5
    $region4: #{tpu_custom_call.1} parent=1 // pred_region
      _
    $region5: #{tpu_custom_call.1} parent=1 // pred_fallthru
      _
    // Predicated region
    $region6: #{tpu_custom_call.1} parent=1 // pred_check
      _
    $region7: #{tpu_custom_call.1} parent=1 // pred_check_branch
      %15 = sbr.rel (0) target = $region9
    $region8: #{tpu_custom_call.1} parent=1 // pred_region
      _
    $region9: #{tpu_custom_call.1} parent=1 // pred_fallthru
      _
    // Predicated region
    $region10: #{tpu_custom_call.1} parent=1 // pred_check
      _
    $region11: #{tpu_custom_call.1} parent=1 // pred_check_branch
      %17 = sbr.rel (0) target = $region13
    $region12: #{tpu_custom_call.1} parent=1 // pred_region
      _
    $region13: #{tpu_custom_call.1} parent=1 // pred_fallthru
      _
    // Predicated region
    $region14: #{tpu_custom_call.1} parent=1 // pred_check
      _
    $region15: #{tpu_custom_call.1} parent=1 // pred_check_branch
      %19 = sbr.rel (0) target = $region17
    $region16: #{tpu_custom_call.1} parent=1 // pred_region
      _
    $region17: #{tpu_custom_call.1} parent=1 // pred_fallthru
      _
    // Predicated region
    $region18: #{tpu_custom_call.1} parent=1 // pred_check
      _
    $region19: #{tpu_custom_call.1} parent=1 // pred_check_branch
      %21 = sbr.rel (0) target = $region21
    $region20: #{tpu_custom_call.1} parent=1 // pred_region
      _
    $region21: #{tpu_custom_call.1} parent=1 // pred_fallthru
      _
    // Predicated region
    $region22: #{tpu_custom_call.1} parent=1 // pred_check
      _
    $region23: #{tpu_custom_call.1} parent=1 // pred_check_branch
      %23 = sbr.rel (0) target = $region25
    $region24: #{tpu_custom_call.1} parent=1 // pred_region
      _
    $region25: #{tpu_custom_call.1} parent=1 // pred_fallthru
      _
    %v24 = vld [vmem:[%s0] sm:$0xff]
    %v25 = vld [vmem:[%s0 + $0x8] sm:$0xff]
    %v26 = vld [vmem:[%s1] sm:$0xff]
    %v27 = vld [vmem:[%s1 + $0x8] sm:$0xff]
    %v28 = vld [vmem:[%s1 + $0x10] sm:$0xff]
    %v29 = vld [vmem:[%s1 + $0x18] sm:$0xff]
    %v30 = vld [vmem:[%s1 + $0x20] sm:$0xff]
    %v31 = vld [vmem:[%s1 + $0x28] sm:$0xff]
    %v32 = vld [vmem:[%s1 + $0x30] sm:$0xff]
    %v33 = vld [vmem:[%s1 + $0x38] sm:$0xff]
    %v34 = vld [vmem:[%s1 + $0x40] sm:$0xff]
    %v35 = vld [vmem:[%s1 + $0x48] sm:$0xff]
    %v36 = vld [vmem:[%s1 + $0x50] sm:$0xff]
    %v37 = vld [vmem:[%s1 + $0x58] sm:$0xff]
    %v38 = vld [vmem:[%s1 + $0x60] sm:$0xff]
    %v39 = vld [vmem:[%s1 + $0x68] sm:$0xff]
    %v40 = vld [vmem:[%s1 + $0x70] sm:$0xff]
    %v41 = vld [vmem:[%s1 + $0x78] sm:$0xff]
    %v42 = vld [vmem:[%s1 + $0x80] sm:$0xff]
    %v43 = vld [vmem:[%s1 + $0x88] sm:$0xff]
    %v44 = vld [vmem:[%s1 + $0x90] sm:$0xff]
    %v45 = vld [vmem:[%s1 + $0x98] sm:$0xff]
    %v46 = vld [vmem:[%s1 + $0xa0] sm:$0xff]
    %v47 = vld [vmem:[%s1 + $0xa8] sm:$0xff]
    %v48 = vld [vmem:[%s1 + $0xb0] sm:$0xff]
    %v49 = vld [vmem:[%s1 + $0xb8] sm:$0xff]
    %v50 = vld [vmem:[%s1 + $0xc0] sm:$0xff]
    %v51 = vld [vmem:[%s1 + $0xc8] sm:$0xff]
    %v52 = vld [vmem:[%s1 + $0xd0] sm:$0xff]
    %v53 = vld [vmem:[%s1 + $0xd8] sm:$0xff]
    %v54 = vld [vmem:[%s1 + $0xe0] sm:$0xff]
    %v55 = vld [vmem:[%s1 + $0xe8] sm:$0xff]
    %v56 = vld [vmem:[%s1 + $0xf0] sm:$0xff]
    %v57 = vld [vmem:[%s1 + $0xf8] sm:$0xff]
    %vm58 = vcmask 64512
    %v60 = vsel %vm58, %v26, 0
    %v63 = vsel %vm58, %v27, 0
    %v66 = vsel %vm58, %v28, 0
    %v69 = vsel %vm58, %v29, 0
    %v72 = vsel %vm58, %v30, 0
    %v75 = vsel %vm58, %v31, 0
    %v78 = vsel %vm58, %v32, 0
    %v81 = vsel %vm58, %v33, 0
    %v84 = vsel %vm58, %v34, 0
    %v87 = vsel %vm58, %v35, 0
    %v90 = vsel %vm58, %v36, 0
    %v93 = vsel %vm58, %v37, 0
    %v96 = vsel %vm58, %v38, 0
    %v99 = vsel %vm58, %v39, 0
    %v102 = vsel %vm58, %v40, 0
    %v105 = vsel %vm58, %v41, 0
    %v108 = vsel %vm58, %v42, 0
    %v111 = vsel %vm58, %v43, 0
    %v114 = vsel %vm58, %v44, 0
    %v117 = vsel %vm58, %v45, 0
    %v120 = vsel %vm58, %v46, 0
    %v123 = vsel %vm58, %v47, 0
    %v126 = vsel %vm58, %v48, 0
    %v129 = vsel %vm58, %v49, 0
    %v132 = vsel %vm58, %v50, 0
    %v135 = vsel %vm58, %v51, 0
    %v138 = vsel %vm58, %v52, 0
    %v141 = vsel %vm58, %v53, 0
    %v144 = vsel %vm58, %v54, 0
    %v147 = vsel %vm58, %v55, 0
    %v150 = vsel %vm58, %v56, 0
    %v153 = vsel %vm58, %v57, 0
    %155 = vmatprep.subr.mxu0 %v25
    %156 = vmatpush1.msra.mxu0 %v24
    %157 = vmatprep.subr.mxu0 0.0
    %158 = vmatpush1.msra.mxu0 0.0
    %159 = vmatprep.subr.mxu0 0.0
    %160 = vmatpush1.msra.mxu0 0.0
    %161 = vmatprep.subr.mxu0 0.0
    %162 = vmatpush1.msra.mxu0 0.0
    %163 = vmatprep.subr.mxu0 0.0
    %164 = vmatpush1.msra.mxu0 0.0
    %165 = vmatprep.subr.mxu0 0.0
    %166 = vmatpush1.msra.mxu0 0.0
    %167 = vmatprep.subr.mxu0 0.0
    %168 = vmatpush1.msra.mxu0 0.0
    %169 = vmatprep.subr.mxu0 0.0
    %170 = vmatpush1.msra.mxu0 0.0
    %171 = vmatprep.subr.mxu0 0.0
    %172 = vmatpush1.msra.mxu0 0.0
    %173 = vmatprep.subr.mxu0 0.0
    %174 = vmatpush1.msra.mxu0 0.0
    %175 = vmatprep.subr.mxu0 0.0
    %176 = vmatpush1.msra.mxu0 0.0
    %177 = vmatprep.subr.mxu0 0.0
    %178 = vmatpush1.msra.mxu0 0.0
    %179 = vmatprep.subr.mxu0 0.0
    %180 = vmatpush1.msra.mxu0 0.0
    %181 = vmatprep.subr.mxu0 0.0
    %182 = vmatpush1.msra.mxu0 0.0
    %183 = vmatprep.subr.mxu0 0.0
    %184 = vmatpush1.msra.mxu0 0.0
    %185 = vmatprep.subr.mxu0 0.0
    %186 = vmatpush1.msra.mxu0 0.0
    %187 = vmatprep.subr.mxu0 0.0
    %188 = vmatpush1.msra.mxu0 0.0
    %189 = vmatprep.subr.mxu0 0.0
    %190 = vmatpush1.msra.mxu0 0.0
    %191 = vmatprep.subr.mxu0 0.0
    %192 = vmatpush1.msra.mxu0 0.0
    %193 = vmatprep.subr.mxu0 0.0
    %194 = vmatpush1.msra.mxu0 0.0
    %195 = vmatprep.subr.mxu0 0.0
    %196 = vmatpush1.msra.mxu0 0.0
    %197 = vmatprep.subr.mxu0 0.0
    %198 = vmatpush1.msra.mxu0 0.0
    %199 = vmatprep.subr.mxu0 0.0
    %200 = vmatpush1.msra.mxu0 0.0
    %201 = vmatprep.subr.mxu0 0.0
    %202 = vmatpush1.msra.mxu0 0.0
    %203 = vmatprep.subr.mxu0 0.0
    %204 = vmatpush1.msra.mxu0 0.0
    %205 = vmatprep.subr.mxu0 0.0
    %206 = vmatpush1.msra.mxu0 0.0
    %207 = vmatprep.subr.mxu0 0.0
    %208 = vmatpush1.msra.mxu0 0.0
    %209 = vmatprep.subr.mxu0 0.0
    %210 = vmatpush1.msra.mxu0 0.0
    %211 = vmatprep.subr.mxu0 0.0
    %212 = vmatpush1.msra.mxu0 0.0
    %213 = vmatprep.subr.mxu0 0.0
    %214 = vmatpush1.msra.mxu0 0.0
    %215 = vmatprep.subr.mxu0 0.0
    %216 = vmatpush1.msra.mxu0 0.0
    %217 = vmatprep.subr.mxu0 0.0
    %218 = vmatpush1.msra.mxu0 0.0
    %219 = vmatprep.mubr.f32.mxu0 0.0
    %220 = vmatmul.mubr.f32.gmra.mrb[0].mxu0 %v60
    %v221 = vpop.f32.mrb[0].mxu0
    %v222 = vadd.f32 0.0, %v221
    %v223 = vpop.f32.mrb[0].mxu0
    %v224 = vadd.f32 0.0, %v223
    %225 = vmatprep.mubr.f32.mxu0 0.0
    %226 = vmatmul.mubr.f32.gmra.mrb[0].mxu0 %v63
    %v227 = vpop.f32.mrb[0].mxu0
    %v228 = vadd.f32 0.0, %v227
    %v229 = vpop.f32.mrb[0].mxu0
    %v230 = vadd.f32 0.0, %v229
    %231 = vmatprep.mubr.f32.mxu0 0.0
    %232 = vmatmul.mubr.f32.gmra.mrb[0].mxu0 %v66
    %v233 = vpop.f32.mrb[0].mxu0
    %v234 = vadd.f32 0.0, %v233
    %v235 = vpop.f32.mrb[0].mxu0
    %v236 = vadd.f32 0.0, %v235
    %237 = vmatprep.mubr.f32.mxu0 0.0
    %238 = vmatmul.mubr.f32.gmra.mrb[0].mxu0 %v69
    %v239 = vpop.f32.mrb[0].mxu0
    %v240 = vadd.f32 0.0, %v239
    %v241 = vpop.f32.mrb[0].mxu0
    %v242 = vadd.f32 0.0, %v241
    %243 = vmatprep.mubr.f32.mxu0 0.0
    %244 = vmatmul.mubr.f32.gmra.mrb[0].mxu0 %v72
    %v245 = vpop.f32.mrb[0].mxu0
    %v246 = vadd.f32 0.0, %v245
    %v247 = vpop.f32.mrb[0].mxu0
    %v248 = vadd.f32 0.0, %v247
    %249 = vmatprep.mubr.f32.mxu0 0.0
    %250 = vmatmul.mubr.f32.gmra.mrb[0].mxu0 %v75
    %v251 = vpop.f32.mrb[0].mxu0
    %v252 = vadd.f32 0.0, %v251
    %v253 = vpop.f32.mrb[0].mxu0
    %v254 = vadd.f32 0.0, %v253
    %255 = vmatprep.mubr.f32.mxu0 0.0
    %256 = vmatmul.mubr.f32.gmra.mrb[0].mxu0 %v78
    %v257 = vpop.f32.mrb[0].mxu0
    %v258 = vadd.f32 0.0, %v257
    %v259 = vpop.f32.mrb[0].mxu0
    %v260 = vadd.f32 0.0, %v259
    %261 = vmatprep.mubr.f32.mxu0 0.0
    %262 = vmatmul.mubr.f32.gmra.mrb[0].mxu0 %v81
    %v263 = vpop.f32.mrb[0].mxu0
    %v264 = vadd.f32 0.0, %v263
    %v265 = vpop.f32.mrb[0].mxu0
    %v266 = vadd.f32 0.0, %v265
    %267 = vmatprep.mubr.f32.mxu0 0.0
    %268 = vmatmul.mubr.f32.gmra.mrb[0].mxu0 %v84
    %v269 = vpop.f32.mrb[0].mxu0
    %v270 = vadd.f32 0.0, %v269
    %v271 = vpop.f32.mrb[0].mxu0
    %v272 = vadd.f32 0.0, %v271
    %273 = vmatprep.mubr.f32.mxu0 0.0
    %274 = vmatmul.mubr.f32.gmra.mrb[0].mxu0 %v87
    %v275 = vpop.f32.mrb[0].mxu0
    %v276 = vadd.f32 0.0, %v275
    %v277 = vpop.f32.mrb[0].mxu0
    %v278 = vadd.f32 0.0, %v277
    %279 = vmatprep.mubr.f32.mxu0 0.0
    %280 = vmatmul.mubr.f32.gmra.mrb[0].mxu0 %v90
    %v281 = vpop.f32.mrb[0].mxu0
    %v282 = vadd.f32 0.0, %v281
    %v283 = vpop.f32.mrb[0].mxu0
    %v284 = vadd.f32 0.0, %v283
    %285 = vmatprep.mubr.f32.mxu0 0.0
    %286 = vmatmul.mubr.f32.gmra.mrb[0].mxu0 %v93
    %v287 = vpop.f32.mrb[0].mxu0
    %v288 = vadd.f32 0.0, %v287
    %v289 = vpop.f32.mrb[0].mxu0
    %v290 = vadd.f32 0.0, %v289
    %291 = vmatprep.mubr.f32.mxu0 0.0
    %292 = vmatmul.mubr.f32.gmra.mrb[0].mxu0 %v96
    %v293 = vpop.f32.mrb[0].mxu0
    %v294 = vadd.f32 0.0, %v293
    %v295 = vpop.f32.mrb[0].mxu0
    %v296 = vadd.f32 0.0, %v295
    %297 = vmatprep.mubr.f32.mxu0 0.0
    %298 = vmatmul.mubr.f32.gmra.mrb[0].mxu0 %v99
    %v299 = vpop.f32.mrb[0].mxu0
    %v300 = vadd.f32 0.0, %v299
    %v301 = vpop.f32.mrb[0].mxu0
    %v302 = vadd.f32 0.0, %v301
    %303 = vmatprep.mubr.f32.mxu0 0.0
    %304 = vmatmul.mubr.f32.gmra.mrb[0].mxu0 %v102
    %v305 = vpop.f32.mrb[0].mxu0
    %v306 = vadd.f32 0.0, %v305
    %v307 = vpop.f32.mrb[0].mxu0
    %v308 = vadd.f32 0.0, %v307
    %309 = vmatprep.mubr.f32.mxu0 0.0
    %310 = vmatmul.mubr.f32.gmra.mrb[0].mxu0 %v105
    %v311 = vpop.f32.mrb[0].mxu0
    %v312 = vadd.f32 0.0, %v311
    %v313 = vpop.f32.mrb[0].mxu0
    %v314 = vadd.f32 0.0, %v313
    %315 = vmatprep.mubr.f32.mxu0 0.0
    %316 = vmatmul.mubr.f32.gmra.mrb[0].mxu0 %v108
    %v317 = vpop.f32.mrb[0].mxu0
    %v318 = vadd.f32 0.0, %v317
    %v319 = vpop.f32.mrb[0].mxu0
    %v320 = vadd.f32 0.0, %v319
    %321 = vmatprep.mubr.f32.mxu0 0.0
    %322 = vmatmul.mubr.f32.gmra.mrb[0].mxu0 %v111
    %v323 = vpop.f32.mrb[0].mxu0
    %v324 = vadd.f32 0.0, %v323
    %v325 = vpop.f32.mrb[0].mxu0
    %v326 = vadd.f32 0.0, %v325
    %327 = vmatprep.mubr.f32.mxu0 0.0
    %328 = vmatmul.mubr.f32.gmra.mrb[0].mxu0 %v114
    %v329 = vpop.f32.mrb[0].mxu0
    %v330 = vadd.f32 0.0, %v329
    %v331 = vpop.f32.mrb[0].mxu0
    %v332 = vadd.f32 0.0, %v331
    %333 = vmatprep.mubr.f32.mxu0 0.0
    %334 = vmatmul.mubr.f32.gmra.mrb[0].mxu0 %v117
    %v335 = vpop.f32.mrb[0].mxu0
    %v336 = vadd.f32 0.0, %v335
    %v337 = vpop.f32.mrb[0].mxu0
    %v338 = vadd.f32 0.0, %v337
    %339 = vmatprep.mubr.f32.mxu0 0.0
    %340 = vmatmul.mubr.f32.gmra.mrb[0].mxu0 %v120
    %v341 = vpop.f32.mrb[0].mxu0
    %v342 = vadd.f32 0.0, %v341
    %v343 = vpop.f32.mrb[0].mxu0
    %v344 = vadd.f32 0.0, %v343
    %345 = vmatprep.mubr.f32.mxu0 0.0
    %346 = vmatmul.mubr.f32.gmra.mrb[0].mxu0 %v123
    %v347 = vpop.f32.mrb[0].mxu0
    %v348 = vadd.f32 0.0, %v347
    %v349 = vpop.f32.mrb[0].mxu0
    %v350 = vadd.f32 0.0, %v349
    %351 = vmatprep.mubr.f32.mxu0 0.0
    %352 = vmatmul.mubr.f32.gmra.mrb[0].mxu0 %v126
    %v353 = vpop.f32.mrb[0].mxu0
    %v354 = vadd.f32 0.0, %v353
    %v355 = vpop.f32.mrb[0].mxu0
    %v356 = vadd.f32 0.0, %v355
    %357 = vmatprep.mubr.f32.mxu0 0.0
    %358 = vmatmul.mubr.f32.gmra.mrb[0].mxu0 %v129
    %v359 = vpop.f32.mrb[0].mxu0
    %v360 = vadd.f32 0.0, %v359
    %v361 = vpop.f32.mrb[0].mxu0
    %v362 = vadd.f32 0.0, %v361
    %363 = vmatprep.mubr.f32.mxu0 0.0
    %364 = vmatmul.mubr.f32.gmra.mrb[0].mxu0 %v132
    %v365 = vpop.f32.mrb[0].mxu0
    %v366 = vadd.f32 0.0, %v365
    %v367 = vpop.f32.mrb[0].mxu0
    %v368 = vadd.f32 0.0, %v367
    %369 = vmatprep.mubr.f32.mxu0 0.0
    %370 = vmatmul.mubr.f32.gmra.mrb[0].mxu0 %v135
    %v371 = vpop.f32.mrb[0].mxu0
    %v372 = vadd.f32 0.0, %v371
    %v373 = vpop.f32.mrb[0].mxu0
    %v374 = vadd.f32 0.0, %v373
    %375 = vmatprep.mubr.f32.mxu0 0.0
    %376 = vmatmul.mubr.f32.gmra.mrb[0].mxu0 %v138
    %v377 = vpop.f32.mrb[0].mxu0
    %v378 = vadd.f32 0.0, %v377
    %v379 = vpop.f32.mrb[0].mxu0
    %v380 = vadd.f32 0.0, %v379
    %381 = vmatprep.mubr.f32.mxu0 0.0
    %382 = vmatmul.mubr.f32.gmra.mrb[0].mxu0 %v141
    %v383 = vpop.f32.mrb[0].mxu0
    %v384 = vadd.f32 0.0, %v383
    %v385 = vpop.f32.mrb[0].mxu0
    %v386 = vadd.f32 0.0, %v385
    %387 = vmatprep.mubr.f32.mxu0 0.0
    %388 = vmatmul.mubr.f32.gmra.mrb[0].mxu0 %v144
    %v389 = vpop.f32.mrb[0].mxu0
    %v390 = vadd.f32 0.0, %v389
    %v391 = vpop.f32.mrb[0].mxu0
    %v392 = vadd.f32 0.0, %v391
    %393 = vmatprep.mubr.f32.mxu0 0.0
    %394 = vmatmul.mubr.f32.gmra.mrb[0].mxu0 %v147
    %v395 = vpop.f32.mrb[0].mxu0
    %v396 = vadd.f32 0.0, %v395
    %v397 = vpop.f32.mrb[0].mxu0
    %v398 = vadd.f32 0.0, %v397
    %399 = vmatprep.mubr.f32.mxu0 0.0
    %400 = vmatmul.mubr.f32.gmra.mrb[0].mxu0 %v150
    %v401 = vpop.f32.mrb[0].mxu0
    %v402 = vadd.f32 0.0, %v401
    %v403 = vpop.f32.mrb[0].mxu0
    %v404 = vadd.f32 0.0, %v403
    %405 = vmatprep.mubr.f32.mxu0 0.0
    %406 = vmatmul.mubr.f32.gmra.mrb[0].mxu0 %v153
    %v407 = vpop.f32.mrb[0].mxu0
    %v408 = vadd.f32 0.0, %v407
    %v409 = vpop.f32.mrb[0].mxu0
    %v410 = vadd.f32 0.0, %v409
    %411 = vdwg.mxu0
    %v412 = vmax.f32 %v222, 0.0
    %v413 = vmax.f32 %v224, 0.0
    %v414 = vmax.f32 %v228, 0.0
    %v415 = vmax.f32 %v230, 0.0
    %v416 = vmax.f32 %v234, 0.0
    %v417 = vmax.f32 %v236, 0.0
    %v418 = vmax.f32 %v240, 0.0
    %v419 = vmax.f32 %v242, 0.0
    %v420 = vmax.f32 %v246, 0.0
    %v421 = vmax.f32 %v248, 0.0
    %v422 = vmax.f32 %v252, 0.0
    %v423 = vmax.f32 %v254, 0.0
    %v424 = vmax.f32 %v258, 0.0
    %v425 = vmax.f32 %v260, 0.0
    %v426 = vmax.f32 %v264, 0.0
    %v427 = vmax.f32 %v266, 0.0
    %v428 = vmax.f32 %v270, 0.0
    %v429 = vmax.f32 %v272, 0.0
    %v430 = vmax.f32 %v276, 0.0
    %v431 = vmax.f32 %v278, 0.0
    %v432 = vmax.f32 %v282, 0.0
    %v433 = vmax.f32 %v284, 0.0
    %v434 = vmax.f32 %v288, 0.0
    %v435 = vmax.f32 %v290, 0.0
    %v436 = vmax.f32 %v294, 0.0
    %v437 = vmax.f32 %v296, 0.0
    %v438 = vmax.f32 %v300, 0.0
    %v439 = vmax.f32 %v302, 0.0
    %v440 = vmax.f32 %v306, 0.0
    %v441 = vmax.f32 %v308, 0.0
    %v442 = vmax.f32 %v312, 0.0
    %v443 = vmax.f32 %v314, 0.0
    %v444 = vmax.f32 %v318, 0.0
    %v445 = vmax.f32 %v320, 0.0
    %v446 = vmax.f32 %v324, 0.0
    %v447 = vmax.f32 %v326, 0.0
    %v448 = vmax.f32 %v330, 0.0
    %v449 = vmax.f32 %v332, 0.0
    %v450 = vmax.f32 %v336, 0.0
    %v451 = vmax.f32 %v338, 0.0
    %v452 = vmax.f32 %v342, 0.0
    %v453 = vmax.f32 %v344, 0.0
    %v454 = vmax.f32 %v348, 0.0
    %v455 = vmax.f32 %v350, 0.0
    %v456 = vmax.f32 %v354, 0.0
    %v457 = vmax.f32 %v356, 0.0
    %v458 = vmax.f32 %v360, 0.0
    %v459 = vmax.f32 %v362, 0.0
    %v460 = vmax.f32 %v366, 0.0
    %v461 = vmax.f32 %v368, 0.0
    %v462 = vmax.f32 %v372, 0.0
    %v463 = vmax.f32 %v374, 0.0
    %v464 = vmax.f32 %v378, 0.0
    %v465 = vmax.f32 %v380, 0.0
    %v466 = vmax.f32 %v384, 0.0
    %v467 = vmax.f32 %v386, 0.0
    %v468 = vmax.f32 %v390, 0.0
    %v469 = vmax.f32 %v392, 0.0
    %v470 = vmax.f32 %v396, 0.0
    %v471 = vmax.f32 %v398, 0.0
    %v472 = vmax.f32 %v402, 0.0
    %v473 = vmax.f32 %v404, 0.0
    %v474 = vmax.f32 %v408, 0.0
    %v475 = vmax.f32 %v410, 0.0
    %v476 = vld [vmem:[%s2] sm:$0xff]
    %v477 = vld [vmem:[%s2 + $0x8] sm:$0xff]
    %v478 = vld [vmem:[%s2 + $0x10] sm:$0xff]
    %v479 = vld [vmem:[%s2 + $0x18] sm:$0xff]
    %v480 = vld [vmem:[%s2 + $0x20] sm:$0xff]
    %v481 = vld [vmem:[%s2 + $0x28] sm:$0xff]
    %v482 = vld [vmem:[%s2 + $0x30] sm:$0xff]
    %v483 = vld [vmem:[%s2 + $0x38] sm:$0xff]
    %v484 = vld [vmem:[%s2 + $0x40] sm:$0xff]
    %v485 = vld [vmem:[%s2 + $0x48] sm:$0xff]
    %v486 = vld [vmem:[%s2 + $0x50] sm:$0xff]
    %v487 = vld [vmem:[%s2 + $0x58] sm:$0xff]
    %v488 = vld [vmem:[%s2 + $0x60] sm:$0xff]
    %v489 = vld [vmem:[%s2 + $0x68] sm:$0xff]
    %v490 = vld [vmem:[%s2 + $0x70] sm:$0xff]
    %v491 = vld [vmem:[%s2 + $0x78] sm:$0xff]
    %v492 = vld [vmem:[%s2 + $0x80] sm:$0xff]
    %v493 = vld [vmem:[%s2 + $0x88] sm:$0xff]
    %v494 = vld [vmem:[%s2 + $0x90] sm:$0xff]
    %v495 = vld [vmem:[%s2 + $0x98] sm:$0xff]
    %v496 = vld [vmem:[%s2 + $0xa0] sm:$0xff]
    %v497 = vld [vmem:[%s2 + $0xa8] sm:$0xff]
    %v498 = vld [vmem:[%s2 + $0xb0] sm:$0xff]
    %v499 = vld [vmem:[%s2 + $0xb8] sm:$0xff]
    %v500 = vld [vmem:[%s2 + $0xc0] sm:$0xff]
    %v501 = vld [vmem:[%s2 + $0xc8] sm:$0xff]
    %v502 = vld [vmem:[%s2 + $0xd0] sm:$0xff]
    %v503 = vld [vmem:[%s2 + $0xd8] sm:$0xff]
    %v504 = vld [vmem:[%s2 + $0xe0] sm:$0xff]
    %v505 = vld [vmem:[%s2 + $0xe8] sm:$0xff]
    %v506 = vld [vmem:[%s2 + $0xf0] sm:$0xff]
    %v507 = vld [vmem:[%s2 + $0xf8] sm:$0xff]
    %v508 = vld [vmem:[%s2 + $0x100] sm:$0xff]
    %v509 = vld [vmem:[%s2 + $0x108] sm:$0xff]
    %v510 = vld [vmem:[%s2 + $0x110] sm:$0xff]
    %v511 = vld [vmem:[%s2 + $0x118] sm:$0xff]
    %v512 = vld [vmem:[%s2 + $0x120] sm:$0xff]
    %v513 = vld [vmem:[%s2 + $0x128] sm:$0xff]
    %v514 = vld [vmem:[%s2 + $0x130] sm:$0xff]
    %v515 = vld [vmem:[%s2 + $0x138] sm:$0xff]
    %v516 = vld [vmem:[%s2 + $0x140] sm:$0xff]
    %v517 = vld [vmem:[%s2 + $0x148] sm:$0xff]
    %v518 = vld [vmem:[%s2 + $0x150] sm:$0xff]
    %v519 = vld [vmem:[%s2 + $0x158] sm:$0xff]
    %v520 = vld [vmem:[%s2 + $0x160] sm:$0xff]
    %v521 = vld [vmem:[%s2 + $0x168] sm:$0xff]
    %v522 = vld [vmem:[%s2 + $0x170] sm:$0xff]
    %v523 = vld [vmem:[%s2 + $0x178] sm:$0xff]
    %v524 = vld [vmem:[%s2 + $0x180] sm:$0xff]
    %v525 = vld [vmem:[%s2 + $0x188] sm:$0xff]
    %v526 = vld [vmem:[%s2 + $0x190] sm:$0xff]
    %v527 = vld [vmem:[%s2 + $0x198] sm:$0xff]
    %v528 = vld [vmem:[%s2 + $0x1a0] sm:$0xff]
    %v529 = vld [vmem:[%s2 + $0x1a8] sm:$0xff]
    %v530 = vld [vmem:[%s2 + $0x1b0] sm:$0xff]
    %v531 = vld [vmem:[%s2 + $0x1b8] sm:$0xff]
    %v532 = vld [vmem:[%s2 + $0x1c0] sm:$0xff]
    %v533 = vld [vmem:[%s2 + $0x1c8] sm:$0xff]
    %v534 = vld [vmem:[%s2 + $0x1d0] sm:$0xff]
    %v535 = vld [vmem:[%s2 + $0x1d8] sm:$0xff]
    %v536 = vld [vmem:[%s2 + $0x1e0] sm:$0xff]
    %v537 = vld [vmem:[%s2 + $0x1e8] sm:$0xff]
    %v538 = vld [vmem:[%s2 + $0x1f0] sm:$0xff]
    %v539 = vld [vmem:[%s2 + $0x1f8] sm:$0xff]
    %v540 = vld [vmem:[%s3] sm:$0xff]
    %v541 = vld [vmem:[%s3 + $0x8] sm:$0xff]
    %v542 = vld [vmem:[%s3 + $0x10] sm:$0xff]
    %v543 = vld [vmem:[%s3 + $0x18] sm:$0xff]
    %v544 = vld [vmem:[%s3 + $0x20] sm:$0xff]
    %v545 = vld [vmem:[%s3 + $0x28] sm:$0xff]
    %v546 = vld [vmem:[%s3 + $0x30] sm:$0xff]
    %v547 = vld [vmem:[%s3 + $0x38] sm:$0xff]
    %v548 = vld [vmem:[%s3 + $0x40] sm:$0xff]
    %v549 = vld [vmem:[%s3 + $0x48] sm:$0xff]
    %v550 = vld [vmem:[%s3 + $0x50] sm:$0xff]
    %v551 = vld [vmem:[%s3 + $0x58] sm:$0xff]
    %v552 = vld [vmem:[%s3 + $0x60] sm:$0xff]
    %v553 = vld [vmem:[%s3 + $0x68] sm:$0xff]
    %v554 = vld [vmem:[%s3 + $0x70] sm:$0xff]
    %v555 = vld [vmem:[%s3 + $0x78] sm:$0xff]
    %v556 = vld [vmem:[%s3 + $0x80] sm:$0xff]
    %v557 = vld [vmem:[%s3 + $0x88] sm:$0xff]
    %v558 = vld [vmem:[%s3 + $0x90] sm:$0xff]
    %v559 = vld [vmem:[%s3 + $0x98] sm:$0xff]
    %v560 = vld [vmem:[%s3 + $0xa0] sm:$0xff]
    %v561 = vld [vmem:[%s3 + $0xa8] sm:$0xff]
    %v562 = vld [vmem:[%s3 + $0xb0] sm:$0xff]
    %v563 = vld [vmem:[%s3 + $0xb8] sm:$0xff]
    %v564 = vld [vmem:[%s3 + $0xc0] sm:$0xff]
    %v565 = vld [vmem:[%s3 + $0xc8] sm:$0xff]
    %v566 = vld [vmem:[%s3 + $0xd0] sm:$0xff]
    %v567 = vld [vmem:[%s3 + $0xd8] sm:$0xff]
    %v568 = vld [vmem:[%s3 + $0xe0] sm:$0xff]
    %v569 = vld [vmem:[%s3 + $0xe8] sm:$0xff]
    %v570 = vld [vmem:[%s3 + $0xf0] sm:$0xff]
    %v571 = vld [vmem:[%s3 + $0xf8] sm:$0xff]
    %573 = vset.pattern.permute.xlu0 0
    %574 = vperm.xlu0 %573, %v540
    %v575 = vpop.permute.xlu0 %574
    %578 = vset.pattern.permute.xlu0 0
    %579 = vperm.xlu0 %578, %v541
    %v580 = vpop.permute.xlu0 %579
    %583 = vset.pattern.permute.xlu0 0
    %584 = vperm.xlu0 %583, %v542
    %v585 = vpop.permute.xlu0 %584
    %588 = vset.pattern.permute.xlu0 0
    %589 = vperm.xlu0 %588, %v543
    %v590 = vpop.permute.xlu0 %589
    %593 = vset.pattern.permute.xlu0 0
    %594 = vperm.xlu0 %593, %v544
    %v595 = vpop.permute.xlu0 %594
    %598 = vset.pattern.permute.xlu0 0
    %599 = vperm.xlu0 %598, %v545
    %v600 = vpop.permute.xlu0 %599
    %603 = vset.pattern.permute.xlu0 0
    %604 = vperm.xlu0 %603, %v546
    %v605 = vpop.permute.xlu0 %604
    %608 = vset.pattern.permute.xlu0 0
    %609 = vperm.xlu0 %608, %v547
    %v610 = vpop.permute.xlu0 %609
    %613 = vset.pattern.permute.xlu0 0
    %614 = vperm.xlu0 %613, %v548
    %v615 = vpop.permute.xlu0 %614
    %618 = vset.pattern.permute.xlu0 0
    %619 = vperm.xlu0 %618, %v549
    %v620 = vpop.permute.xlu0 %619
    %623 = vset.pattern.permute.xlu0 0
    %624 = vperm.xlu0 %623, %v550
    %v625 = vpop.permute.xlu0 %624
    %628 = vset.pattern.permute.xlu0 0
    %629 = vperm.xlu0 %628, %v551
    %v630 = vpop.permute.xlu0 %629
    %633 = vset.pattern.permute.xlu0 0
    %634 = vperm.xlu0 %633, %v552
    %v635 = vpop.permute.xlu0 %634
    %638 = vset.pattern.permute.xlu0 0
    %639 = vperm.xlu0 %638, %v553
    %v640 = vpop.permute.xlu0 %639
    %643 = vset.pattern.permute.xlu0 0
    %644 = vperm.xlu0 %643, %v554
    %v645 = vpop.permute.xlu0 %644
    %648 = vset.pattern.permute.xlu0 0
    %649 = vperm.xlu0 %648, %v555
    %v650 = vpop.permute.xlu0 %649
    %653 = vset.pattern.permute.xlu0 0
    %654 = vperm.xlu0 %653, %v556
    %v655 = vpop.permute.xlu0 %654
    %658 = vset.pattern.permute.xlu0 0
    %659 = vperm.xlu0 %658, %v557
    %v660 = vpop.permute.xlu0 %659
    %663 = vset.pattern.permute.xlu0 0
    %664 = vperm.xlu0 %663, %v558
    %v665 = vpop.permute.xlu0 %664
    %668 = vset.pattern.permute.xlu0 0
    %669 = vperm.xlu0 %668, %v559
    %v670 = vpop.permute.xlu0 %669
    %673 = vset.pattern.permute.xlu0 0
    %674 = vperm.xlu0 %673, %v560
    %v675 = vpop.permute.xlu0 %674
    %678 = vset.pattern.permute.xlu0 0
    %679 = vperm.xlu0 %678, %v561
    %v680 = vpop.permute.xlu0 %679
    %683 = vset.pattern.permute.xlu0 0
    %684 = vperm.xlu0 %683, %v562
    %v685 = vpop.permute.xlu0 %684
    %688 = vset.pattern.permute.xlu0 0
    %689 = vperm.xlu0 %688, %v563
    %v690 = vpop.permute.xlu0 %689
    %693 = vset.pattern.permute.xlu0 0
    %694 = vperm.xlu0 %693, %v564
    %v695 = vpop.permute.xlu0 %694
    %698 = vset.pattern.permute.xlu0 0
    %699 = vperm.xlu0 %698, %v565
    %v700 = vpop.permute.xlu0 %699
    %703 = vset.pattern.permute.xlu0 0
    %704 = vperm.xlu0 %703, %v566
    %v705 = vpop.permute.xlu0 %704
    %708 = vset.pattern.permute.xlu0 0
    %709 = vperm.xlu0 %708, %v567
    %v710 = vpop.permute.xlu0 %709
    %713 = vset.pattern.permute.xlu0 0
    %714 = vperm.xlu0 %713, %v568
    %v715 = vpop.permute.xlu0 %714
    %718 = vset.pattern.permute.xlu0 0
    %719 = vperm.xlu0 %718, %v569
    %v720 = vpop.permute.xlu0 %719
    %723 = vset.pattern.permute.xlu0 0
    %724 = vperm.xlu0 %723, %v570
    %v725 = vpop.permute.xlu0 %724
    %728 = vset.pattern.permute.xlu0 0
    %729 = vperm.xlu0 %728, %v571
    %v730 = vpop.permute.xlu0 %729
    %732 = vmatprep.subr.mxu0 %v413
    %733 = vmatpush1.msra.mxu0 %v412
    %734 = vmatprep.subr.mxu0 %v415
    %735 = vmatpush1.msra.mxu0 %v414
    %736 = vmatprep.subr.mxu0 %v417
    %737 = vmatpush1.msra.mxu0 %v416
    %738 = vmatprep.subr.mxu0 %v419
    %739 = vmatpush1.msra.mxu0 %v418
    %740 = vmatprep.subr.mxu0 %v421
    %741 = vmatpush1.msra.mxu0 %v420
    %742 = vmatprep.subr.mxu0 %v423
    %743 = vmatpush1.msra.mxu0 %v422
    %744 = vmatprep.subr.mxu0 %v425
    %745 = vmatpush1.msra.mxu0 %v424
    %746 = vmatprep.subr.mxu0 %v427
    %747 = vmatpush1.msra.mxu0 %v426
    %748 = vmatprep.subr.mxu0 %v429
    %749 = vmatpush1.msra.mxu0 %v428
    %750 = vmatprep.subr.mxu0 %v431
    %751 = vmatpush1.msra.mxu0 %v430
    %752 = vmatprep.subr.mxu0 %v433
    %753 = vmatpush1.msra.mxu0 %v432
    %754 = vmatprep.subr.mxu0 %v435
    %755 = vmatpush1.msra.mxu0 %v434
    %756 = vmatprep.subr.mxu0 %v437
    %757 = vmatpush1.msra.mxu0 %v436
    %758 = vmatprep.subr.mxu0 %v439
    %759 = vmatpush1.msra.mxu0 %v438
    %760 = vmatprep.subr.mxu0 %v441
    %761 = vmatpush1.msra.mxu0 %v440
    %762 = vmatprep.subr.mxu0 %v443
    %763 = vmatpush1.msra.mxu0 %v442
    %764 = vmatprep.subr.mxu0 %v445
    %765 = vmatpush1.msra.mxu0 %v444
    %766 = vmatprep.subr.mxu0 %v447
    %767 = vmatpush1.msra.mxu0 %v446
    %768 = vmatprep.subr.mxu0 %v449
    %769 = vmatpush1.msra.mxu0 %v448
    %770 = vmatprep.subr.mxu0 %v451
    %771 = vmatpush1.msra.mxu0 %v450
    %772 = vmatprep.subr.mxu0 %v453
    %773 = vmatpush1.msra.mxu0 %v452
    %774 = vmatprep.subr.mxu0 %v455
    %775 = vmatpush1.msra.mxu0 %v454
    %776 = vmatprep.subr.mxu0 %v457
    %777 = vmatpush1.msra.mxu0 %v456
    %778 = vmatprep.subr.mxu0 %v459
    %779 = vmatpush1.msra.mxu0 %v458
    %780 = vmatprep.subr.mxu0 %v461
    %781 = vmatpush1.msra.mxu0 %v460
    %782 = vmatprep.subr.mxu0 %v463
    %783 = vmatpush1.msra.mxu0 %v462
    %784 = vmatprep.subr.mxu0 %v465
    %785 = vmatpush1.msra.mxu0 %v464
    %786 = vmatprep.subr.mxu0 %v467
    %787 = vmatpush1.msra.mxu0 %v466
    %788 = vmatprep.subr.mxu0 %v469
    %789 = vmatpush1.msra.mxu0 %v468
    %790 = vmatprep.subr.mxu0 %v471
    %791 = vmatpush1.msra.mxu0 %v470
    %792 = vmatprep.subr.mxu0 %v473
    %793 = vmatpush1.msra.mxu0 %v472
    %794 = vmatprep.subr.mxu0 %v475
    %795 = vmatpush1.msra.mxu0 %v474
    %796 = vmatprep.mubr.f32.mxu0 %v477
    %797 = vmatmul.mubr.f32.gmra.mrb[0].mxu0 %v476
    %v798 = vpop.f32.mrb[0].mxu0
    %v799 = vadd.f32 %v575, %v798
    %v800 = vpop.f32.mrb[0].mxu0
    %v801 = vadd.f32 %v575, %v800
    %802 = vmatprep.mubr.f32.mxu0 %v479
    %803 = vmatmul.mubr.f32.gmra.mrb[0].mxu0 %v478
    %v804 = vpop.f32.mrb[0].mxu0
    %v805 = vadd.f32 %v580, %v804
    %v806 = vpop.f32.mrb[0].mxu0
    %v807 = vadd.f32 %v580, %v806
    %808 = vmatprep.mubr.f32.mxu0 %v481
    %809 = vmatmul.mubr.f32.gmra.mrb[0].mxu0 %v480
    %v810 = vpop.f32.mrb[0].mxu0
    %v811 = vadd.f32 %v585, %v810
    %v812 = vpop.f32.mrb[0].mxu0
    %v813 = vadd.f32 %v585, %v812
    %814 = vmatprep.mubr.f32.mxu0 %v483
    %815 = vmatmul.mubr.f32.gmra.mrb[0].mxu0 %v482
    %v816 = vpop.f32.mrb[0].mxu0
    %v817 = vadd.f32 %v590, %v816
    %v818 = vpop.f32.mrb[0].mxu0
    %v819 = vadd.f32 %v590, %v818
    %820 = vmatprep.mubr.f32.mxu0 %v485
    %821 = vmatmul.mubr.f32.gmra.mrb[0].mxu0 %v484
    %v822 = vpop.f32.mrb[0].mxu0
    %v823 = vadd.f32 %v595, %v822
    %v824 = vpop.f32.mrb[0].mxu0
    %v825 = vadd.f32 %v595, %v824
    %826 = vmatprep.mubr.f32.mxu0 %v487
    %827 = vmatmul.mubr.f32.gmra.mrb[0].mxu0 %v486
    %v828 = vpop.f32.mrb[0].mxu0
    %v829 = vadd.f32 %v600, %v828
    %v830 = vpop.f32.mrb[0].mxu0
    %v831 = vadd.f32 %v600, %v830
    %832 = vmatprep.mubr.f32.mxu0 %v489
    %833 = vmatmul.mubr.f32.gmra.mrb[0].mxu0 %v488
    %v834 = vpop.f32.mrb[0].mxu0
    %v835 = vadd.f32 %v605, %v834
    %v836 = vpop.f32.mrb[0].mxu0
    %v837 = vadd.f32 %v605, %v836
    %838 = vmatprep.mubr.f32.mxu0 %v491
    %839 = vmatmul.mubr.f32.gmra.mrb[0].mxu0 %v490
    %v840 = vpop.f32.mrb[0].mxu0
    %v841 = vadd.f32 %v610, %v840
    %v842 = vpop.f32.mrb[0].mxu0
    %v843 = vadd.f32 %v610, %v842
    %844 = vmatprep.mubr.f32.mxu0 %v493
    %845 = vmatmul.mubr.f32.gmra.mrb[0].mxu0 %v492
    %v846 = vpop.f32.mrb[0].mxu0
    %v847 = vadd.f32 %v615, %v846
    %v848 = vpop.f32.mrb[0].mxu0
    %v849 = vadd.f32 %v615, %v848
    %850 = vmatprep.mubr.f32.mxu0 %v495
    %851 = vmatmul.mubr.f32.gmra.mrb[0].mxu0 %v494
    %v852 = vpop.f32.mrb[0].mxu0
    %v853 = vadd.f32 %v620, %v852
    %v854 = vpop.f32.mrb[0].mxu0
    %v855 = vadd.f32 %v620, %v854
    %856 = vmatprep.mubr.f32.mxu0 %v497
    %857 = vmatmul.mubr.f32.gmra.mrb[0].mxu0 %v496
    %v858 = vpop.f32.mrb[0].mxu0
    %v859 = vadd.f32 %v625, %v858
    %v860 = vpop.f32.mrb[0].mxu0
    %v861 = vadd.f32 %v625, %v860
    %862 = vmatprep.mubr.f32.mxu0 %v499
    %863 = vmatmul.mubr.f32.gmra.mrb[0].mxu0 %v498
    %v864 = vpop.f32.mrb[0].mxu0
    %v865 = vadd.f32 %v630, %v864
    %v866 = vpop.f32.mrb[0].mxu0
    %v867 = vadd.f32 %v630, %v866
    %868 = vmatprep.mubr.f32.mxu0 %v501
    %869 = vmatmul.mubr.f32.gmra.mrb[0].mxu0 %v500
    %v870 = vpop.f32.mrb[0].mxu0
    %v871 = vadd.f32 %v635, %v870
    %v872 = vpop.f32.mrb[0].mxu0
    %v873 = vadd.f32 %v635, %v872
    %874 = vmatprep.mubr.f32.mxu0 %v503
    %875 = vmatmul.mubr.f32.gmra.mrb[0].mxu0 %v502
    %v876 = vpop.f32.mrb[0].mxu0
    %v877 = vadd.f32 %v640, %v876
    %v878 = vpop.f32.mrb[0].mxu0
    %v879 = vadd.f32 %v640, %v878
    %880 = vmatprep.mubr.f32.mxu0 %v505
    %881 = vmatmul.mubr.f32.gmra.mrb[0].mxu0 %v504
    %v882 = vpop.f32.mrb[0].mxu0
    %v883 = vadd.f32 %v645, %v882
    %v884 = vpop.f32.mrb[0].mxu0
    %v885 = vadd.f32 %v645, %v884
    %886 = vmatprep.mubr.f32.mxu0 %v507
    %887 = vmatmul.mubr.f32.gmra.mrb[0].mxu0 %v506
    %v888 = vpop.f32.mrb[0].mxu0
    %v889 = vadd.f32 %v650, %v888
    %v890 = vpop.f32.mrb[0].mxu0
    %v891 = vadd.f32 %v650, %v890
    %892 = vmatprep.mubr.f32.mxu0 %v509
    %893 = vmatmul.mubr.f32.gmra.mrb[0].mxu0 %v508
    %v894 = vpop.f32.mrb[0].mxu0
    %v895 = vadd.f32 %v655, %v894
    %v896 = vpop.f32.mrb[0].mxu0
    %v897 = vadd.f32 %v655, %v896
    %898 = vmatprep.mubr.f32.mxu0 %v511
    %899 = vmatmul.mubr.f32.gmra.mrb[0].mxu0 %v510
    %v900 = vpop.f32.mrb[0].mxu0
    %v901 = vadd.f32 %v660, %v900
    %v902 = vpop.f32.mrb[0].mxu0
    %v903 = vadd.f32 %v660, %v902
    %904 = vmatprep.mubr.f32.mxu0 %v513
    %905 = vmatmul.mubr.f32.gmra.mrb[0].mxu0 %v512
    %v906 = vpop.f32.mrb[0].mxu0
    %v907 = vadd.f32 %v665, %v906
    %v908 = vpop.f32.mrb[0].mxu0
    %v909 = vadd.f32 %v665, %v908
    %910 = vmatprep.mubr.f32.mxu0 %v515
    %911 = vmatmul.mubr.f32.gmra.mrb[0].mxu0 %v514
    %v912 = vpop.f32.mrb[0].mxu0
    %v913 = vadd.f32 %v670, %v912
    %v914 = vpop.f32.mrb[0].mxu0
    %v915 = vadd.f32 %v670, %v914
    %916 = vmatprep.mubr.f32.mxu0 %v517
    %917 = vmatmul.mubr.f32.gmra.mrb[0].mxu0 %v516
    %v918 = vpop.f32.mrb[0].mxu0
    %v919 = vadd.f32 %v675, %v918
    %v920 = vpop.f32.mrb[0].mxu0
    %v921 = vadd.f32 %v675, %v920
    %922 = vmatprep.mubr.f32.mxu0 %v519
    %923 = vmatmul.mubr.f32.gmra.mrb[0].mxu0 %v518
    %v924 = vpop.f32.mrb[0].mxu0
    %v925 = vadd.f32 %v680, %v924
    %v926 = vpop.f32.mrb[0].mxu0
    %v927 = vadd.f32 %v680, %v926
    %928 = vmatprep.mubr.f32.mxu0 %v521
    %929 = vmatmul.mubr.f32.gmra.mrb[0].mxu0 %v520
    %v930 = vpop.f32.mrb[0].mxu0
    %v931 = vadd.f32 %v685, %v930
    %v932 = vpop.f32.mrb[0].mxu0
    %v933 = vadd.f32 %v685, %v932
    %934 = vmatprep.mubr.f32.mxu0 %v523
    %935 = vmatmul.mubr.f32.gmra.mrb[0].mxu0 %v522
    %v936 = vpop.f32.mrb[0].mxu0
    %v937 = vadd.f32 %v690, %v936
    %v938 = vpop.f32.mrb[0].mxu0
    %v939 = vadd.f32 %v690, %v938
    %940 = vmatprep.mubr.f32.mxu0 %v525
    %941 = vmatmul.mubr.f32.gmra.mrb[0].mxu0 %v524
    %v942 = vpop.f32.mrb[0].mxu0
    %v943 = vadd.f32 %v695, %v942
    %v944 = vpop.f32.mrb[0].mxu0
    %v945 = vadd.f32 %v695, %v944
    %946 = vmatprep.mubr.f32.mxu0 %v527
    %947 = vmatmul.mubr.f32.gmra.mrb[0].mxu0 %v526
    %v948 = vpop.f32.mrb[0].mxu0
    %v949 = vadd.f32 %v700, %v948
    %v950 = vpop.f32.mrb[0].mxu0
    %v951 = vadd.f32 %v700, %v950
    %952 = vmatprep.mubr.f32.mxu0 %v529
    %953 = vmatmul.mubr.f32.gmra.mrb[0].mxu0 %v528
    %v954 = vpop.f32.mrb[0].mxu0
    %v955 = vadd.f32 %v705, %v954
    %v956 = vpop.f32.mrb[0].mxu0
    %v957 = vadd.f32 %v705, %v956
    %958 = vmatprep.mubr.f32.mxu0 %v531
    %959 = vmatmul.mubr.f32.gmra.mrb[0].mxu0 %v530
    %v960 = vpop.f32.mrb[0].mxu0
    %v961 = vadd.f32 %v710, %v960
    %v962 = vpop.f32.mrb[0].mxu0
    %v963 = vadd.f32 %v710, %v962
    %964 = vmatprep.mubr.f32.mxu0 %v533
    %965 = vmatmul.mubr.f32.gmra.mrb[0].mxu0 %v532
    %v966 = vpop.f32.mrb[0].mxu0
    %v967 = vadd.f32 %v715, %v966
    %v968 = vpop.f32.mrb[0].mxu0
    %v969 = vadd.f32 %v715, %v968
    %970 = vmatprep.mubr.f32.mxu0 %v535
    %971 = vmatmul.mubr.f32.gmra.mrb[0].mxu0 %v534
    %v972 = vpop.f32.mrb[0].mxu0
    %v973 = vadd.f32 %v720, %v972
    %v974 = vpop.f32.mrb[0].mxu0
    %v975 = vadd.f32 %v720, %v974
    %976 = vmatprep.mubr.f32.mxu0 %v537
    %977 = vmatmul.mubr.f32.gmra.mrb[0].mxu0 %v536
    %v978 = vpop.f32.mrb[0].mxu0
    %v979 = vadd.f32 %v725, %v978
    %v980 = vpop.f32.mrb[0].mxu0
    %v981 = vadd.f32 %v725, %v980
    %982 = vmatprep.mubr.f32.mxu0 %v539
    %983 = vmatmul.mubr.f32.gmra.mrb[0].mxu0 %v538
    %v984 = vpop.f32.mrb[0].mxu0
    %v985 = vadd.f32 %v730, %v984
    %v986 = vpop.f32.mrb[0].mxu0
    %v987 = vadd.f32 %v730, %v986
    %988 = vdwg.mxu0
    %v989 = vmax.f32 %v799, 0.0
    %v990 = vmax.f32 %v801, 0.0
    %v991 = vmax.f32 %v805, 0.0
    %v992 = vmax.f32 %v807, 0.0
    %v993 = vmax.f32 %v811, 0.0
    %v994 = vmax.f32 %v813, 0.0
    %v995 = vmax.f32 %v817, 0.0
    %v996 = vmax.f32 %v819, 0.0
    %v997 = vmax.f32 %v823, 0.0
    %v998 = vmax.f32 %v825, 0.0
    %v999 = vmax.f32 %v829, 0.0
    %v1000 = vmax.f32 %v831, 0.0
    %v1001 = vmax.f32 %v835, 0.0
    %v1002 = vmax.f32 %v837, 0.0
    %v1003 = vmax.f32 %v841, 0.0
    %v1004 = vmax.f32 %v843, 0.0
    %v1005 = vmax.f32 %v847, 0.0
    %v1006 = vmax.f32 %v849, 0.0
    %v1007 = vmax.f32 %v853, 0.0
    %v1008 = vmax.f32 %v855, 0.0
    %v1009 = vmax.f32 %v859, 0.0
    %v1010 = vmax.f32 %v861, 0.0
    %v1011 = vmax.f32 %v865, 0.0
    %v1012 = vmax.f32 %v867, 0.0
    %v1013 = vmax.f32 %v871, 0.0
    %v1014 = vmax.f32 %v873, 0.0
    %v1015 = vmax.f32 %v877, 0.0
    %v1016 = vmax.f32 %v879, 0.0
    %v1017 = vmax.f32 %v883, 0.0
    %v1018 = vmax.f32 %v885, 0.0
    %v1019 = vmax.f32 %v889, 0.0
    %v1020 = vmax.f32 %v891, 0.0
    %v1021 = vmax.f32 %v895, 0.0
    %v1022 = vmax.f32 %v897, 0.0
    %v1023 = vmax.f32 %v901, 0.0
    %v1024 = vmax.f32 %v903, 0.0
    %v1025 = vmax.f32 %v907, 0.0
    %v1026 = vmax.f32 %v909, 0.0
    %v1027 = vmax.f32 %v913, 0.0
    %v1028 = vmax.f32 %v915, 0.0
    %v1029 = vmax.f32 %v919, 0.0
    %v1030 = vmax.f32 %v921, 0.0
    %v1031 = vmax.f32 %v925, 0.0
    %v1032 = vmax.f32 %v927, 0.0
    %v1033 = vmax.f32 %v931, 0.0
    %v1034 = vmax.f32 %v933, 0.0
    %v1035 = vmax.f32 %v937, 0.0
    %v1036 = vmax.f32 %v939, 0.0
    %v1037 = vmax.f32 %v943, 0.0
    %v1038 = vmax.f32 %v945, 0.0
    %v1039 = vmax.f32 %v949, 0.0
    %v1040 = vmax.f32 %v951, 0.0
    %v1041 = vmax.f32 %v955, 0.0
    %v1042 = vmax.f32 %v957, 0.0
    %v1043 = vmax.f32 %v961, 0.0
    %v1044 = vmax.f32 %v963, 0.0
    %v1045 = vmax.f32 %v967, 0.0
    %v1046 = vmax.f32 %v969, 0.0
    %v1047 = vmax.f32 %v973, 0.0
    %v1048 = vmax.f32 %v975, 0.0
    %v1049 = vmax.f32 %v979, 0.0
    %v1050 = vmax.f32 %v981, 0.0
    %v1051 = vmax.f32 %v985, 0.0
    %v1052 = vmax.f32 %v987, 0.0
    %v1053 = vld [vmem:[%s4] sm:$0xff]
    %v1054 = vld [vmem:[%s4 + $0x8] sm:$0xff]
    %v1055 = vld [vmem:[%s5] sm:$0xff]
    %1057 = vset.pattern.permute.xlu0 0
    %1058 = vperm.xlu0 %1057, %v1055
    %v1059 = vpop.permute.xlu0 %1058
    %1061 = vmatprep.subr.mxu0 %v990
    %1062 = vmatpush1.msra.mxu0 %v989
    %1063 = vmatprep.subr.mxu0 %v992
    %1064 = vmatpush1.msra.mxu0 %v991
    %1065 = vmatprep.subr.mxu0 %v994
    %1066 = vmatpush1.msra.mxu0 %v993
    %1067 = vmatprep.subr.mxu0 %v996
    %1068 = vmatpush1.msra.mxu0 %v995
    %1069 = vmatprep.subr.mxu0 %v998
    %1070 = vmatpush1.msra.mxu0 %v997
    %1071 = vmatprep.subr.mxu0 %v1000
    %1072 = vmatpush1.msra.mxu0 %v999
    %1073 = vmatprep.subr.mxu0 %v1002
    %1074 = vmatpush1.msra.mxu0 %v1001
    %1075 = vmatprep.subr.mxu0 %v1004
    %1076 = vmatpush1.msra.mxu0 %v1003
    %1077 = vmatprep.subr.mxu0 %v1006
    %1078 = vmatpush1.msra.mxu0 %v1005
    %1079 = vmatprep.subr.mxu0 %v1008
    %1080 = vmatpush1.msra.mxu0 %v1007
    %1081 = vmatprep.subr.mxu0 %v1010
    %1082 = vmatpush1.msra.mxu0 %v1009
    %1083 = vmatprep.subr.mxu0 %v1012
    %1084 = vmatpush1.msra.mxu0 %v1011
    %1085 = vmatprep.subr.mxu0 %v1014
    %1086 = vmatpush1.msra.mxu0 %v1013
    %1087 = vmatprep.subr.mxu0 %v1016
    %1088 = vmatpush1.msra.mxu0 %v1015
    %1089 = vmatprep.subr.mxu0 %v1018
    %1090 = vmatpush1.msra.mxu0 %v1017
    %1091 = vmatprep.subr.mxu0 %v1020
    %1092 = vmatpush1.msra.mxu0 %v1019
    %1093 = vmatprep.subr.mxu0 %v1022
    %1094 = vmatpush1.msra.mxu0 %v1021
    %1095 = vmatprep.subr.mxu0 %v1024
    %1096 = vmatpush1.msra.mxu0 %v1023
    %1097 = vmatprep.subr.mxu0 %v1026
    %1098 = vmatpush1.msra.mxu0 %v1025
    %1099 = vmatprep.subr.mxu0 %v1028
    %1100 = vmatpush1.msra.mxu0 %v1027
    %1101 = vmatprep.subr.mxu0 %v1030
    %1102 = vmatpush1.msra.mxu0 %v1029
    %1103 = vmatprep.subr.mxu0 %v1032
    %1104 = vmatpush1.msra.mxu0 %v1031
    %1105 = vmatprep.subr.mxu0 %v1034
    %1106 = vmatpush1.msra.mxu0 %v1033
    %1107 = vmatprep.subr.mxu0 %v1036
    %1108 = vmatpush1.msra.mxu0 %v1035
    %1109 = vmatprep.subr.mxu0 %v1038
    %1110 = vmatpush1.msra.mxu0 %v1037
    %1111 = vmatprep.subr.mxu0 %v1040
    %1112 = vmatpush1.msra.mxu0 %v1039
    %1113 = vmatprep.subr.mxu0 %v1042
    %1114 = vmatpush1.msra.mxu0 %v1041
    %1115 = vmatprep.subr.mxu0 %v1044
    %1116 = vmatpush1.msra.mxu0 %v1043
    %1117 = vmatprep.subr.mxu0 %v1046
    %1118 = vmatpush1.msra.mxu0 %v1045
    %1119 = vmatprep.subr.mxu0 %v1048
    %1120 = vmatpush1.msra.mxu0 %v1047
    %1121 = vmatprep.subr.mxu0 %v1050
    %1122 = vmatpush1.msra.mxu0 %v1049
    %1123 = vmatprep.subr.mxu0 %v1052
    %1124 = vmatpush1.msra.mxu0 %v1051
    %1125 = vmatprep.mubr.f32.mxu0 %v1054
    %1126 = vmatmul.mubr.f32.gmra.mrb[0].mxu0 %v1053
    %v1127 = vpop.f32.mrb[0].mxu0
    %v1128 = vadd.f32 %v1059, %v1127
    %v1129 = vpop.f32.mrb[0].mxu0
    %v1130 = vadd.f32 %v1059, %v1129
    %1131 = vdwg.mxu0
    %1132 = vst [vmem:[#allocation2] sm:$0xff] %v1128
    %1133 = vst [vmem:[#allocation2 + $0x8] sm:$0xff] %v1130
    // Predicated region
    $region26: #{tpu_custom_call.1} parent=1 // pred_check
      _
    $region27: #{tpu_custom_call.1} parent=1 // pred_check_branch
      %1135 = sbr.rel (0) target = $region29
    $region28: #{tpu_custom_call.1} parent=1 // pred_region
      %s1137 = ssub.s32 256, 256
      %1138 = vsyncadd [#allocation3], %s1137
      %s1140 = sshll.u32 [#allocation2], 4
      %s1141 = int_to_ptr.vmem [resolvable:$true] %s1140
      %1143 = dma.vmem_to_hbm [thread:$0]  %s1141, 256, %s6, [#allocation3]
    $region29: #{tpu_custom_call.1} parent=1 // pred_fallthru
      _
    // Predicated region
    $region30: #{tpu_custom_call.1} parent=1 // pred_check
      _
    $region31: #{tpu_custom_call.1} parent=1 // pred_check_branch
      %1145 = sbr.rel (0) target = $region33
    $region32: #{tpu_custom_call.1} parent=1 // pred_region
      %1146 = dma.done [#allocation3], 256
    $region33: #{tpu_custom_call.1} parent=1 // pred_fallthru
      _
    %1147 = vsyncpa [#allocation3], 1

</llo_original>
